<compile_context>
chip_gen: v6e
topology: v6e:2x2x1
jax: 0.10.0
libtpu: 0.0.40
codegen_flags: <defaults>
</compile_context>

<pallas_src>
import functools

import jax
import jax.numpy as jnp
from jax.experimental import pallas as pl
from jax.experimental.pallas import tpu as pltpu

HIDDEN = 128
HALF = HIDDEN // 2
LN_EPS = 1e-5


def _round_up(n, m):
    return ((n + m - 1) // m) * m


def _layernorm(h, gamma, beta):
    # single pass: var = E[x^2] - E[x]^2 (shorter cross-lane dependency chain)
    mu = jnp.mean(h, axis=-1, keepdims=True)
    ms = jnp.mean(h * h, axis=-1, keepdims=True)
    var = jnp.maximum(ms - mu * mu, 0.0)
    return (h - mu) * jax.lax.rsqrt(var + LN_EPS) * gamma + beta


def _sigmoid(x):
    # numerically stable, routes through EUP tanh
    return 0.5 * (jnp.tanh(0.5 * x) + 1.0)


def _softplus(x):
    # numerically stable softplus
    return jnp.maximum(x, 0.0) + jnp.log1p(jnp.exp(-jnp.abs(x)))


def slam_kernel(x_ref, w1_ref, w2_ref, wh1_ref, wh2_ref, vec_ref, bh1_ref,
                bh2_ref, out_ref, *, out_dim, pack_rows):
    """One batch tile of the fused SLAM network.

    out_ref has shape (tile // pack_rows, pack_rows * Wp): `pack_rows` batch
    rows are packed row-major into each 128-lane output row.
    """
    R = pack_rows
    rows = out_ref.shape[0]                  # tile // R
    Wp = out_ref.shape[-1] // R              # lanes per packed batch row
    O = out_dim

    # Read input rows.  When packing, read them in interleaved order
    # (g, g+R, g+2R, ...) so the final store is R contiguous lane-group slices
    # (row-major packed output -> free reshape in the wrapper).
    if R > 1:
        xs = [x_ref[pl.ds(g, rows, R), :] for g in range(R)]
        xb = jnp.concatenate(xs, axis=0).astype(jnp.bfloat16)
    else:
        xb = x_ref[...].astype(jnp.bfloat16)

    b1, g1, be1 = vec_ref[0:1, :], vec_ref[1:2, :], vec_ref[2:3, :]
    b2, g2, be2 = vec_ref[3:4, :], vec_ref[4:5, :], vec_ref[5:6, :]

    # ---- shared trunk (bf16 matmuls, f32 accumulation; Dropout = identity) ----
    h = jnp.dot(xb, w1_ref[...], preferred_element_type=jnp.float32) + b1
    h = jnp.maximum(_layernorm(h, g1, be1), 0.0)
    h = jnp.dot(h.astype(jnp.bfloat16), w2_ref[...],
                preferred_element_type=jnp.float32) + b2
    h = jnp.maximum(_layernorm(h, g2, be2), 0.0)

    # ---- fused heads: one (128,192) matmul then one block-diagonal (192,Wp) ----
    hh = jnp.maximum(
        jnp.dot(h.astype(jnp.bfloat16), wh1_ref[...],
                preferred_element_type=jnp.float32) + bh1_ref[...], 0.0)
    heads = jnp.dot(hh.astype(jnp.bfloat16), wh2_ref[...],
                    preferred_element_type=jnp.float32) + bh2_ref[...]
    # heads columns are already at their final lane offsets:
    #   [0,O) raw distances, [O,2O) validity logits, [2O,3O) uncertainty pre-act

    lane = jax.lax.broadcasted_iota(jnp.int32, heads.shape, 1)
    slab = jnp.where((lane >= O) & (lane < 2 * O), _sigmoid(heads), heads)
    slab = jnp.where((lane >= 2 * O) & (lane < 3 * O), _softplus(heads), slab)
    slab = jnp.where(lane < 3 * O, slab, 0.0)        # deterministic zero pad

    if R > 1:
        # contiguous lane-group stores; batch row R*r+g lands at out[r, g*Wp:]
        for g in range(R):
            out_ref[:, g * Wp:(g + 1) * Wp] = slab[g * rows:(g + 1) * rows, :]
    else:
        out_ref[...] = slab


def init_params(input_dim, output_dim, key):
    """Deterministic synthetic parameters (Linear weights stored as (in, out))."""
    ks = jax.random.split(key, 16)

    def lin(k, fan_in, fan_out):
        kw, kb = jax.random.split(k)
        bound = 1.0 / jnp.sqrt(fan_in)
        w = jax.random.uniform(kw, (fan_in, fan_out), jnp.float32, -bound, bound)
        b = jax.random.uniform(kb, (1, fan_out), jnp.float32, -bound, bound)
        return w, b

    p = {}
    p["w1"], p["b1"] = lin(ks[0], input_dim, HIDDEN)
    p["g1"] = jnp.ones((1, HIDDEN), jnp.float32)
    p["be1"] = jnp.zeros((1, HIDDEN), jnp.float32)
    p["w2"], p["b2"] = lin(ks[1], HIDDEN, HIDDEN)
    p["g2"] = jnp.ones((1, HIDDEN), jnp.float32)
    p["be2"] = jnp.zeros((1, HIDDEN), jnp.float32)
    p["wd1"], p["bd1"] = lin(ks[2], HIDDEN, HALF)
    p["wd2"], p["bd2"] = lin(ks[3], HALF, output_dim)
    p["wv1"], p["bv1"] = lin(ks[4], HIDDEN, HALF)
    p["wv2"], p["bv2"] = lin(ks[5], HALF, output_dim)
    p["wu1"], p["bu1"] = lin(ks[6], HIDDEN, HALF)
    p["wu2"], p["bu2"] = lin(ks[7], HALF, output_dim)
    return p


@functools.partial(jax.jit, static_argnames=("tile_b",))
def slam_forward(x, params, tile_b=2048):
    B, input_dim = x.shape
    O = params["wd2"].shape[1]

    # ---- packed-output geometry: R batch rows per 128-lane output row ----
    W = 3 * O                                    # raw | validity | uncertainty
    R = 1
    for cand in (2, 4, 8, 16, 32, 64, 128):
        if 128 // cand >= W:
            R = cand
    Wp = (128 // R) if R > 1 else _round_up(W, 128)
    out_lanes = R * Wp                           # 128 when packing

    # ---- pack parameters (tiny, once per call) ----
    wh1 = jnp.concatenate([params["wd1"], params["wv1"], params["wu1"]], axis=1)  # (128,192)
    bh1 = jnp.concatenate([params["bd1"], params["bv1"], params["bu1"]], axis=1)  # (1,192)
    # second head layer: block-diagonal, pre-placed at final lane offsets
    wh2 = jnp.zeros((3 * HALF, Wp), jnp.float32)
    wh2 = wh2.at[0 * HALF:1 * HALF, 0 * O:1 * O].set(params["wd2"])
    wh2 = wh2.at[1 * HALF:2 * HALF, 1 * O:2 * O].set(params["wv2"])
    wh2 = wh2.at[2 * HALF:3 * HALF, 2 * O:3 * O].set(params["wu2"])
    bh2 = jnp.zeros((1, Wp), jnp.float32)
    bh2 = bh2.at[:, 0 * O:1 * O].set(params["bd2"])
    bh2 = bh2.at[:, 1 * O:2 * O].set(params["bv2"])
    bh2 = bh2.at[:, 2 * O:3 * O].set(params["bu2"])
    # six (1,128) bias/gamma/beta vectors as a single input stream
    vecs = jnp.concatenate([params["b1"], params["g1"], params["be1"],
                            params["b2"], params["g2"], params["be2"]], axis=0)

    w1 = params["w1"].astype(jnp.bfloat16)
    w2 = params["w2"].astype(jnp.bfloat16)
    wh1 = wh1.astype(jnp.bfloat16)
    wh2 = wh2.astype(jnp.bfloat16)
    # NOTE: x stays f32 -- the kernel casts; no extra wrapper-side HBM pass.

    # ---- batch tiling: >= 2 grid steps when the batch allows (v7x megacore) ----
    step = 8 * R                                  # keeps out-block rows 8-aligned
    half = _round_up(pl.cdiv(B, 2), step)
    tile = min(_round_up(tile_b, step), half)
    if tile >= B:
        tile = _round_up(B, R)                    # single step covers the batch
    grid = pl.cdiv(_round_up(B, R), tile)
    b_pad = grid * tile
    xin = x
    if b_pad != B:
        # TODO(synk): a second small pallas_call for the remainder would avoid
        # this extra copy of x when B is not a multiple of the tile.
        xin = jnp.pad(x, ((0, b_pad - B), (0, 0)))

    param_args = [w1, w2, wh1, wh2, vecs, bh1, bh2]
    in_specs = [pl.BlockSpec((tile, input_dim), lambda i: (i, 0))] + [
        pl.BlockSpec(a.shape, lambda i: (0, 0)) for a in param_args
    ]
    rows_per_step = tile // R
    out_specs = pl.BlockSpec((rows_per_step, out_lanes), lambda i: (i, 0))
    out_shape = jax.ShapeDtypeStruct((b_pad // R, out_lanes), jnp.float32)

    kernel = functools.partial(slam_kernel, out_dim=O, pack_rows=R)
    packed = pl.pallas_call(
        kernel,
        grid=(grid,),
        in_specs=in_specs,
        out_specs=out_specs,
        out_shape=out_shape,
        compiler_params=pltpu.CompilerParams(
            dimension_semantics=("parallel",)),
    )(xin, *param_args)

    # ---- unpack: free row-major reshape, then tiny slices ----
    slab2d = packed.reshape(b_pad, Wp) if R > 1 else packed
    raw = slab2d[:B, 0:O]
    validity = slab2d[:B, O:2 * O]
    uncertainty = slab2d[:B, 2 * O:3 * O]
    distances = jnp.where(validity < 0.5, jnp.float32(jnp.nan), raw)
    return {
        "distances": distances,
        "raw_distances": raw,
        "validity": validity,
        "uncertainty": uncertainty,
    }


def reference_forward(x, params):
    """Pure-JAX f32 reference of the PyTorch module (eval mode)."""
    def ln(h, g, b):
        mu = jnp.mean(h, axis=-1, keepdims=True)
        var = jnp.mean((h - mu) ** 2, axis=-1, keepdims=True)
        return (h - mu) / jnp.sqrt(var + LN_EPS) * g + b

    h = jnp.maximum(ln(x @ params["w1"] + params["b1"],
                       params["g1"], params["be1"]), 0.0)
    h = jnp.maximum(ln(h @ params["w2"] + params["b2"],
                       params["g2"], params["be2"]), 0.0)

    def head(w1, b1, w2, b2):
        return jnp.maximum(h @ w1 + b1, 0.0) @ w2 + b2

    raw = head(params["wd1"], params["bd1"], params["wd2"], params["bd2"])
    val = jax.nn.sigmoid(head(params["wv1"], params["bv1"],
                              params["wv2"], params["bv2"]))
    unc = jax.nn.softplus(head(params["wu1"], params["bu1"],
                               params["wu2"], params["bu2"]))
    return raw, val, unc


if __name__ == "__main__":
    input_dim = 32
    output_dim = 8
    batch = 16

    key = jax.random.PRNGKey(0)
    kx, kp = jax.random.split(key)
    x = jax.random.normal(kx, (batch, input_dim), jnp.float32)
    params = init_params(input_dim, output_dim, kp)

    out = slam_forward(x, params)
    jax.block_until_ready(out)

    # shape checks
    for k in ("distances", "raw_distances", "validity", "uncertainty"):
        assert out[k].shape == (batch, output_dim), (k, out[k].shape)

    # masked entries must be NaN exactly where validity < 0.5
    nan_mask = jnp.isnan(out["distances"])
    assert bool(jnp.all(nan_mask == (out["validity"] < 0.5)))
    # raw distances finite, validity in [0,1], uncertainty (softplus) >= 0
    assert bool(jnp.all(jnp.isfinite(out["raw_distances"])))
    assert bool(jnp.all((out["validity"] >= 0.0) & (out["validity"] <= 1.0)))
    assert bool(jnp.all(out["uncertainty"] >= 0.0))

    # loose numerical check vs. f32 pure-JAX reference (kernel uses bf16 matmuls)
    raw_ref, val_ref, unc_ref = reference_forward(x, params)
    assert bool(jnp.allclose(out["raw_distances"], raw_ref, atol=0.15, rtol=0.15))
    assert bool(jnp.allclose(out["validity"], val_ref, atol=0.15, rtol=0.15))
    assert bool(jnp.allclose(out["uncertainty"], unc_ref, atol=0.15, rtol=0.15))

    print("KERNEL_OK")
</pallas_src>

<mosaic_0001>
module attributes {stable_mosaic.version = 11 : i64} {
  func.func @slam_kernel(%arg0: i32, %arg1: memref<16x32xf32, #tpu.memory_space<vmem>>, %arg2: memref<32x128xbf16, #tpu.memory_space<vmem>>, %arg3: memref<128x128xbf16, #tpu.memory_space<vmem>>, %arg4: memref<128x192xbf16, #tpu.memory_space<vmem>>, %arg5: memref<192x32xbf16, #tpu.memory_space<vmem>>, %arg6: memref<6x128xf32, #tpu.memory_space<vmem>>, %arg7: memref<1x192xf32, #tpu.memory_space<vmem>>, %arg8: memref<1x32xf32, #tpu.memory_space<vmem>>, %arg9: memref<4x128xf32, #tpu.memory_space<vmem>>) attributes {dimension_semantics = [#tpu.dimension_semantics<parallel>], iteration_bounds = array<i64: 1>, scalar_prefetch = 0 : i64, scratch_operands = 0 : i64, tpu.core_type = #tpu.core_type<tc>, window_params = [{transform_indices = @transform_0, window_bounds = array<i64: 16, 32>}, {pipeline_mode = #tpu.pipeline_mode<synchronous>, transform_indices = @transform_1, window_bounds = array<i64: 32, 128>}, {pipeline_mode = #tpu.pipeline_mode<synchronous>, transform_indices = @transform_2, window_bounds = array<i64: 128, 128>}, {pipeline_mode = #tpu.pipeline_mode<synchronous>, transform_indices = @transform_3, window_bounds = array<i64: 128, 192>}, {pipeline_mode = #tpu.pipeline_mode<synchronous>, transform_indices = @transform_4, window_bounds = array<i64: 192, 32>}, {pipeline_mode = #tpu.pipeline_mode<synchronous>, transform_indices = @transform_5, window_bounds = array<i64: 6, 128>}, {pipeline_mode = #tpu.pipeline_mode<synchronous>, transform_indices = @transform_6, window_bounds = array<i64: 1, 192>}, {pipeline_mode = #tpu.pipeline_mode<synchronous>, transform_indices = @transform_7, window_bounds = array<i64: 1, 32>}, {transform_indices = @transform_8, window_bounds = array<i64: 4, 128>}]} {
    %c0 = arith.constant 0 : index
    %c0_0 = arith.constant 0 : index
    %0 = tpu.strided_load %arg1[%c0, %c0_0] {strides = array<i32: 4, 1>} : memref<16x32xf32, #tpu.memory_space<vmem>>, vector<4x32xf32>
    %c1 = arith.constant 1 : index
    %c0_1 = arith.constant 0 : index
    %1 = tpu.strided_load %arg1[%c1, %c0_1] {strides = array<i32: 4, 1>} : memref<16x32xf32, #tpu.memory_space<vmem>>, vector<4x32xf32>
    %c2 = arith.constant 2 : index
    %c0_2 = arith.constant 0 : index
    %2 = tpu.strided_load %arg1[%c2, %c0_2] {strides = array<i32: 4, 1>} : memref<16x32xf32, #tpu.memory_space<vmem>>, vector<4x32xf32>
    %c3 = arith.constant 3 : index
    %c0_3 = arith.constant 0 : index
    %3 = tpu.strided_load %arg1[%c3, %c0_3] {strides = array<i32: 4, 1>} : memref<16x32xf32, #tpu.memory_space<vmem>>, vector<4x32xf32>
    %4 = tpu.concatenate %0, %1, %2, %3 in 0 : vector<4x32xf32>, vector<4x32xf32>, vector<4x32xf32>, vector<4x32xf32> -> vector<16x32xf32>
    %5 = arith.truncf %4 : vector<16x32xf32> to vector<16x32xbf16>
    %c0_4 = arith.constant 0 : index
    %c0_5 = arith.constant 0 : index
    %6 = vector.load %arg6[%c0_4, %c0_5] : memref<6x128xf32, #tpu.memory_space<vmem>>, vector<1x128xf32>
    %c1_6 = arith.constant 1 : index
    %c0_7 = arith.constant 0 : index
    %7 = vector.load %arg6[%c1_6, %c0_7] : memref<6x128xf32, #tpu.memory_space<vmem>>, vector<1x128xf32>
    %c2_8 = arith.constant 2 : index
    %c0_9 = arith.constant 0 : index
    %8 = vector.load %arg6[%c2_8, %c0_9] : memref<6x128xf32, #tpu.memory_space<vmem>>, vector<1x128xf32>
    %c3_10 = arith.constant 3 : index
    %c0_11 = arith.constant 0 : index
    %9 = vector.load %arg6[%c3_10, %c0_11] : memref<6x128xf32, #tpu.memory_space<vmem>>, vector<1x128xf32>
    %c4 = arith.constant 4 : index
    %c0_12 = arith.constant 0 : index
    %10 = vector.load %arg6[%c4, %c0_12] : memref<6x128xf32, #tpu.memory_space<vmem>>, vector<1x128xf32>
    %c5 = arith.constant 5 : index
    %c0_13 = arith.constant 0 : index
    %11 = vector.load %arg6[%c5, %c0_13] : memref<6x128xf32, #tpu.memory_space<vmem>>, vector<1x128xf32>
    %c0_14 = arith.constant 0 : index
    %c0_15 = arith.constant 0 : index
    %12 = vector.load %arg2[%c0_14, %c0_15] : memref<32x128xbf16, #tpu.memory_space<vmem>>, vector<32x128xbf16>
    %cst = arith.constant dense<0.000000e+00> : vector<16x128xf32>
    %13 = tpu.matmul %5, %12, %cst {dimension_numbers = #tpu.dot_dimension_numbers<[1], [0], [0], [1], [0, 0, 1, 1], [], []>} : vector<16x32xbf16>, vector<32x128xbf16>, vector<16x128xf32> -> vector<16x128xf32>
    %14 = vector.broadcast %6 : vector<1x128xf32> to vector<16x128xf32>
    %15 = arith.addf %13, %14 : vector<16x128xf32>
    %cst_16 = arith.constant dense<0.000000e+00> : vector<16xf32>
    %16 = vector.multi_reduction <add>, %15, %cst_16 [1] : vector<16x128xf32> to vector<16xf32>
    %17 = vector.shape_cast %16 : vector<16xf32> to vector<16x1xf32>
    %cst_17 = arith.constant 1.280000e+02 : f32
    %18 = vector.broadcast %cst_17 : f32 to vector<16x1xf32>
    %19 = arith.divf %17, %18 : vector<16x1xf32>
    %20 = arith.mulf %15, %15 : vector<16x128xf32>
    %cst_18 = arith.constant dense<0.000000e+00> : vector<16xf32>
    %21 = vector.multi_reduction <add>, %20, %cst_18 [1] : vector<16x128xf32> to vector<16xf32>
    %22 = vector.shape_cast %21 : vector<16xf32> to vector<16x1xf32>
    %cst_19 = arith.constant 1.280000e+02 : f32
    %23 = vector.broadcast %cst_19 : f32 to vector<16x1xf32>
    %24 = arith.divf %22, %23 : vector<16x1xf32>
    %25 = arith.mulf %19, %19 : vector<16x1xf32>
    %26 = arith.subf %24, %25 : vector<16x1xf32>
    %cst_20 = arith.constant 0.000000e+00 : f32
    %27 = vector.broadcast %cst_20 : f32 to vector<16x1xf32>
    %28 = arith.maximumf %26, %27 : vector<16x1xf32>
    %29 = vector.broadcast %19 : vector<16x1xf32> to vector<16x128xf32>
    %30 = arith.subf %15, %29 : vector<16x128xf32>
    %cst_21 = arith.constant 9.99999974E-6 : f32
    %31 = vector.broadcast %cst_21 : f32 to vector<16x1xf32>
    %32 = arith.addf %28, %31 : vector<16x1xf32>
    %33 = math.rsqrt %32 : vector<16x1xf32>
    %34 = vector.broadcast %33 : vector<16x1xf32> to vector<16x128xf32>
    %35 = arith.mulf %30, %34 : vector<16x128xf32>
    %36 = vector.broadcast %7 : vector<1x128xf32> to vector<16x128xf32>
    %37 = arith.mulf %35, %36 : vector<16x128xf32>
    %38 = vector.broadcast %8 : vector<1x128xf32> to vector<16x128xf32>
    %39 = arith.addf %37, %38 : vector<16x128xf32>
    %cst_22 = arith.constant 0.000000e+00 : f32
    %40 = vector.broadcast %cst_22 : f32 to vector<16x128xf32>
    %41 = arith.maximumf %39, %40 : vector<16x128xf32>
    %42 = arith.truncf %41 : vector<16x128xf32> to vector<16x128xbf16>
    %c0_23 = arith.constant 0 : index
    %c0_24 = arith.constant 0 : index
    %43 = vector.load %arg3[%c0_23, %c0_24] : memref<128x128xbf16, #tpu.memory_space<vmem>>, vector<128x128xbf16>
    %cst_25 = arith.constant dense<0.000000e+00> : vector<16x128xf32>
    %44 = tpu.matmul %42, %43, %cst_25 {dimension_numbers = #tpu.dot_dimension_numbers<[1], [0], [0], [1], [0, 0, 1, 1], [], []>} : vector<16x128xbf16>, vector<128x128xbf16>, vector<16x128xf32> -> vector<16x128xf32>
    %45 = vector.broadcast %9 : vector<1x128xf32> to vector<16x128xf32>
    %46 = arith.addf %44, %45 : vector<16x128xf32>
    %cst_26 = arith.constant dense<0.000000e+00> : vector<16xf32>
    %47 = vector.multi_reduction <add>, %46, %cst_26 [1] : vector<16x128xf32> to vector<16xf32>
    %48 = vector.shape_cast %47 : vector<16xf32> to vector<16x1xf32>
    %cst_27 = arith.constant 1.280000e+02 : f32
    %49 = vector.broadcast %cst_27 : f32 to vector<16x1xf32>
    %50 = arith.divf %48, %49 : vector<16x1xf32>
    %51 = arith.mulf %46, %46 : vector<16x128xf32>
    %cst_28 = arith.constant dense<0.000000e+00> : vector<16xf32>
    %52 = vector.multi_reduction <add>, %51, %cst_28 [1] : vector<16x128xf32> to vector<16xf32>
    %53 = vector.shape_cast %52 : vector<16xf32> to vector<16x1xf32>
    %cst_29 = arith.constant 1.280000e+02 : f32
    %54 = vector.broadcast %cst_29 : f32 to vector<16x1xf32>
    %55 = arith.divf %53, %54 : vector<16x1xf32>
    %56 = arith.mulf %50, %50 : vector<16x1xf32>
    %57 = arith.subf %55, %56 : vector<16x1xf32>
    %cst_30 = arith.constant 0.000000e+00 : f32
    %58 = vector.broadcast %cst_30 : f32 to vector<16x1xf32>
    %59 = arith.maximumf %57, %58 : vector<16x1xf32>
    %60 = vector.broadcast %50 : vector<16x1xf32> to vector<16x128xf32>
    %61 = arith.subf %46, %60 : vector<16x128xf32>
    %cst_31 = arith.constant 9.99999974E-6 : f32
    %62 = vector.broadcast %cst_31 : f32 to vector<16x1xf32>
    %63 = arith.addf %59, %62 : vector<16x1xf32>
    %64 = math.rsqrt %63 : vector<16x1xf32>
    %65 = vector.broadcast %64 : vector<16x1xf32> to vector<16x128xf32>
    %66 = arith.mulf %61, %65 : vector<16x128xf32>
    %67 = vector.broadcast %10 : vector<1x128xf32> to vector<16x128xf32>
    %68 = arith.mulf %66, %67 : vector<16x128xf32>
    %69 = vector.broadcast %11 : vector<1x128xf32> to vector<16x128xf32>
    %70 = arith.addf %68, %69 : vector<16x128xf32>
    %cst_32 = arith.constant 0.000000e+00 : f32
    %71 = vector.broadcast %cst_32 : f32 to vector<16x128xf32>
    %72 = arith.maximumf %70, %71 : vector<16x128xf32>
    %73 = arith.truncf %72 : vector<16x128xf32> to vector<16x128xbf16>
    %c0_33 = arith.constant 0 : index
    %c0_34 = arith.constant 0 : index
    %74 = vector.load %arg4[%c0_33, %c0_34] : memref<128x192xbf16, #tpu.memory_space<vmem>>, vector<128x192xbf16>
    %cst_35 = arith.constant dense<0.000000e+00> : vector<16x192xf32>
    %75 = tpu.matmul %73, %74, %cst_35 {dimension_numbers = #tpu.dot_dimension_numbers<[1], [0], [0], [1], [0, 0, 1, 1], [], []>} : vector<16x128xbf16>, vector<128x192xbf16>, vector<16x192xf32> -> vector<16x192xf32>
    %c0_36 = arith.constant 0 : index
    %c0_37 = arith.constant 0 : index
    %76 = vector.load %arg7[%c0_36, %c0_37] : memref<1x192xf32, #tpu.memory_space<vmem>>, vector<1x192xf32>
    %77 = vector.broadcast %76 : vector<1x192xf32> to vector<16x192xf32>
    %78 = arith.addf %75, %77 : vector<16x192xf32>
    %cst_38 = arith.constant 0.000000e+00 : f32
    %79 = vector.broadcast %cst_38 : f32 to vector<16x192xf32>
    %80 = arith.maximumf %78, %79 : vector<16x192xf32>
    %81 = arith.truncf %80 : vector<16x192xf32> to vector<16x192xbf16>
    %c0_39 = arith.constant 0 : index
    %c0_40 = arith.constant 0 : index
    %82 = vector.load %arg5[%c0_39, %c0_40] : memref<192x32xbf16, #tpu.memory_space<vmem>>, vector<192x32xbf16>
    %cst_41 = arith.constant dense<0.000000e+00> : vector<16x32xf32>
    %83 = tpu.matmul %81, %82, %cst_41 {dimension_numbers = #tpu.dot_dimension_numbers<[1], [0], [0], [1], [0, 0, 1, 1], [], []>} : vector<16x192xbf16>, vector<192x32xbf16>, vector<16x32xf32> -> vector<16x32xf32>
    %c0_42 = arith.constant 0 : index
    %c0_43 = arith.constant 0 : index
    %84 = vector.load %arg8[%c0_42, %c0_43] : memref<1x32xf32, #tpu.memory_space<vmem>>, vector<1x32xf32>
    %85 = vector.broadcast %84 : vector<1x32xf32> to vector<16x32xf32>
    %86 = arith.addf %83, %85 : vector<16x32xf32>
    %87 = tpu.iota {dimensions = array<i32: 1>} : vector<16x32xi32>
    %c8_i32 = arith.constant 8 : i32
    %88 = vector.broadcast %c8_i32 : i32 to vector<16x32xi32>
    %89 = arith.cmpi sge, %87, %88 : vector<16x32xi32>
    %c16_i32 = arith.constant 16 : i32
    %90 = vector.broadcast %c16_i32 : i32 to vector<16x32xi32>
    %91 = arith.cmpi slt, %87, %90 : vector<16x32xi32>
    %92 = arith.andi %89, %91 : vector<16x32xi1>
    %cst_44 = arith.constant 5.000000e-01 : f32
    %93 = vector.broadcast %cst_44 : f32 to vector<16x32xf32>
    %94 = arith.mulf %93, %86 : vector<16x32xf32>
    %95 = math.tanh %94 : vector<16x32xf32>
    %cst_45 = arith.constant 1.000000e+00 : f32
    %96 = vector.broadcast %cst_45 : f32 to vector<16x32xf32>
    %97 = arith.addf %95, %96 : vector<16x32xf32>
    %cst_46 = arith.constant 5.000000e-01 : f32
    %98 = vector.broadcast %cst_46 : f32 to vector<16x32xf32>
    %99 = arith.mulf %98, %97 : vector<16x32xf32>
    %100 = arith.select %92, %99, %86 : vector<16x32xi1>, vector<16x32xf32>
    %c16_i32_47 = arith.constant 16 : i32
    %101 = vector.broadcast %c16_i32_47 : i32 to vector<16x32xi32>
    %102 = arith.cmpi sge, %87, %101 : vector<16x32xi32>
    %c24_i32 = arith.constant 24 : i32
    %103 = vector.broadcast %c24_i32 : i32 to vector<16x32xi32>
    %104 = arith.cmpi slt, %87, %103 : vector<16x32xi32>
    %105 = arith.andi %102, %104 : vector<16x32xi1>
    %cst_48 = arith.constant 0.000000e+00 : f32
    %106 = vector.broadcast %cst_48 : f32 to vector<16x32xf32>
    %107 = arith.maximumf %86, %106 : vector<16x32xf32>
    %108 = math.absf %86 : vector<16x32xf32>
    %cst_49 = arith.constant 0.000000e+00 : f32
    %109 = vector.broadcast %cst_49 : f32 to vector<16x32xf32>
    %110 = arith.subf %109, %108 : vector<16x32xf32>
    %111 = math.exp %110 : vector<16x32xf32>
    %112 = math.log1p %111 : vector<16x32xf32>
    %113 = arith.addf %107, %112 : vector<16x32xf32>
    %114 = arith.select %105, %113, %100 : vector<16x32xi1>, vector<16x32xf32>
    %c24_i32_50 = arith.constant 24 : i32
    %115 = vector.broadcast %c24_i32_50 : i32 to vector<16x32xi32>
    %116 = arith.cmpi slt, %87, %115 : vector<16x32xi32>
    %cst_51 = arith.constant 0.000000e+00 : f32
    %117 = vector.broadcast %cst_51 : f32 to vector<16x32xf32>
    %118 = arith.select %116, %114, %117 : vector<16x32xi1>, vector<16x32xf32>
    %119 = vector.extract_strided_slice %118 {offsets = [0, 0], sizes = [4, 32], strides = [1, 1]} : vector<16x32xf32> to vector<4x32xf32>
    %c0_52 = arith.constant 0 : index
    %c0_53 = arith.constant 0 : index
    %120 = vector.load %arg9[%c0_52, %c0_53] : memref<4x128xf32, #tpu.memory_space<vmem>>, vector<4x32xf32>
    tpu.vector_store %arg9[%c0_52, %c0_53], %119 {strides = array<i32>} : memref<4x128xf32, #tpu.memory_space<vmem>>, vector<4x32xf32>,
    %121 = vector.extract_strided_slice %118 {offsets = [4, 0], sizes = [4, 32], strides = [1, 1]} : vector<16x32xf32> to vector<4x32xf32>
    %c0_54 = arith.constant 0 : index
    %c32 = arith.constant 32 : index
    %122 = vector.load %arg9[%c0_54, %c32] : memref<4x128xf32, #tpu.memory_space<vmem>>, vector<4x32xf32>
    tpu.vector_store %arg9[%c0_54, %c32], %121 {strides = array<i32>} : memref<4x128xf32, #tpu.memory_space<vmem>>, vector<4x32xf32>,
    %123 = vector.extract_strided_slice %118 {offsets = [8, 0], sizes = [4, 32], strides = [1, 1]} : vector<16x32xf32> to vector<4x32xf32>
    %c0_55 = arith.constant 0 : index
    %c64 = arith.constant 64 : index
    %124 = vector.load %arg9[%c0_55, %c64] : memref<4x128xf32, #tpu.memory_space<vmem>>, vector<4x32xf32>
    tpu.vector_store %arg9[%c0_55, %c64], %123 {strides = array<i32>} : memref<4x128xf32, #tpu.memory_space<vmem>>, vector<4x32xf32>,
    %125 = vector.extract_strided_slice %118 {offsets = [12, 0], sizes = [4, 32], strides = [1, 1]} : vector<16x32xf32> to vector<4x32xf32>
    %c0_56 = arith.constant 0 : index
    %c96 = arith.constant 96 : index
    %126 = vector.load %arg9[%c0_56, %c96] : memref<4x128xf32, #tpu.memory_space<vmem>>, vector<4x32xf32>
    tpu.vector_store %arg9[%c0_56, %c96], %125 {strides = array<i32>} : memref<4x128xf32, #tpu.memory_space<vmem>>, vector<4x32xf32>,
    return
  }
  func.func @transform_0(%arg0: i32) -> (i32, i32) {
    %c0_i32 = arith.constant 0 : i32
    %c0_i32_0 = arith.constant 0 : i32
    return %arg0, %c0_i32 : i32, i32
  }
  func.func @transform_1(%arg0: i32) -> (i32, i32) {
    %c0_i32 = arith.constant 0 : i32
    %c0_i32_0 = arith.constant 0 : i32
    %c0_i32_1 = arith.constant 0 : i32
    return %c0_i32, %c0_i32_0 : i32, i32
  }
  func.func @transform_2(%arg0: i32) -> (i32, i32) {
    %c0_i32 = arith.constant 0 : i32
    %c0_i32_0 = arith.constant 0 : i32
    %c0_i32_1 = arith.constant 0 : i32
    return %c0_i32, %c0_i32_0 : i32, i32
  }
  func.func @transform_3(%arg0: i32) -> (i32, i32) {
    %c0_i32 = arith.constant 0 : i32
    %c0_i32_0 = arith.constant 0 : i32
    %c0_i32_1 = arith.constant 0 : i32
    return %c0_i32, %c0_i32_0 : i32, i32
  }
  func.func @transform_4(%arg0: i32) -> (i32, i32) {
    %c0_i32 = arith.constant 0 : i32
    %c0_i32_0 = arith.constant 0 : i32
    %c0_i32_1 = arith.constant 0 : i32
    return %c0_i32, %c0_i32_0 : i32, i32
  }
  func.func @transform_5(%arg0: i32) -> (i32, i32) {
    %c0_i32 = arith.constant 0 : i32
    %c0_i32_0 = arith.constant 0 : i32
    %c0_i32_1 = arith.constant 0 : i32
    return %c0_i32, %c0_i32_0 : i32, i32
  }
  func.func @transform_6(%arg0: i32) -> (i32, i32) {
    %c0_i32 = arith.constant 0 : i32
    %c0_i32_0 = arith.constant 0 : i32
    %c0_i32_1 = arith.constant 0 : i32
    return %c0_i32, %c0_i32_0 : i32, i32
  }
  func.func @transform_7(%arg0: i32) -> (i32, i32) {
    %c0_i32 = arith.constant 0 : i32
    %c0_i32_0 = arith.constant 0 : i32
    %c0_i32_1 = arith.constant 0 : i32
    return %c0_i32, %c0_i32_0 : i32, i32
  }
  func.func @transform_8(%arg0: i32) -> (i32, i32) {
    %c0_i32 = arith.constant 0 : i32
    %c0_i32_0 = arith.constant 0 : i32
    return %arg0, %c0_i32 : i32, i32
  }
}

</mosaic_0001>

<llo_original>
// kernel: slam_forward.1
$region0: #{slam_forward.1}
  #allocation0 [shape = 'u32[]', space=smem, size = 0x4, offset = 0x4, fixed_abs, tag = 'smem constant byte address 0x4 - core index']
  #allocation1 [shape = 'u32[144,128]{1,0:T(1,128)}', space=vmem, size = 0x12000, scoped, tag = 'internal scratch']
  %s0 = inlined_call_operand.vmem [shape: f32[16,32], index: 0, kind: input, shape index: {}]
  %s1 = inlined_call_operand.vmem [shape: bf16[32,128], index: 1, kind: input, shape index: {}]
  %s2 = inlined_call_operand.vmem [shape: bf16[128,128], index: 2, kind: input, shape index: {}]
  %s3 = inlined_call_operand.vmem [shape: bf16[128,192], index: 3, kind: input, shape index: {}]
  %s4 = inlined_call_operand.vmem [shape: bf16[192,32], index: 4, kind: input, shape index: {}]
  %s5 = inlined_call_operand.vmem [shape: f32[6,128], index: 5, kind: input, shape index: {}]
  %s6 = inlined_call_operand.vmem [shape: f32[1,192], index: 6, kind: input, shape index: {}]
  %s7 = inlined_call_operand.vmem [shape: f32[1,32], index: 7, kind: input, shape index: {}]
  %s8 = inlined_call_operand.vmem [shape: f32[4,128], index: 8, kind: output, shape index: {}]
  %s9 = sld [smem:[#allocation0]]
  $region42: #{slam_forward.1} parent=0
    _
  %s11 = ssub.s32 1, %s9
  %s12 = scalar_select 0, %s11, %s9
  // Predicated region
  $region2: #{slam_forward.1} parent=0 // pred_check
    _
  $region3: #{slam_forward.1} parent=0 // pred_check_branch
    %14 = sbr.rel (0) target = $region5
  $region4: #{slam_forward.1} parent=0 // pred_region
    _
  $region5: #{slam_forward.1} parent=0 // pred_fallthru
    _
  // Predicated region
  $region6: #{slam_forward.1} parent=0 // pred_check
    _
  $region7: #{slam_forward.1} parent=0 // pred_check_branch
    %16 = sbr.rel (0) target = $region9
  $region8: #{slam_forward.1} parent=0 // pred_region
    _
  $region9: #{slam_forward.1} parent=0 // pred_fallthru
    _
  // Predicated region
  $region10: #{slam_forward.1} parent=0 // pred_check
    _
  $region11: #{slam_forward.1} parent=0 // pred_check_branch
    %18 = sbr.rel (0) target = $region13
  $region12: #{slam_forward.1} parent=0 // pred_region
    _
  $region13: #{slam_forward.1} parent=0 // pred_fallthru
    _
  // Predicated region
  $region14: #{slam_forward.1} parent=0 // pred_check
    _
  $region15: #{slam_forward.1} parent=0 // pred_check_branch
    %20 = sbr.rel (0) target = $region17
  $region16: #{slam_forward.1} parent=0 // pred_region
    _
  $region17: #{slam_forward.1} parent=0 // pred_fallthru
    _
  // Predicated region
  $region18: #{slam_forward.1} parent=0 // pred_check
    _
  $region19: #{slam_forward.1} parent=0 // pred_check_branch
    %22 = sbr.rel (0) target = $region21
  $region20: #{slam_forward.1} parent=0 // pred_region
    _
  $region21: #{slam_forward.1} parent=0 // pred_fallthru
    _
  // Predicated region
  $region22: #{slam_forward.1} parent=0 // pred_check
    _
  $region23: #{slam_forward.1} parent=0 // pred_check_branch
    %24 = sbr.rel (0) target = $region25
  $region24: #{slam_forward.1} parent=0 // pred_region
    _
  $region25: #{slam_forward.1} parent=0 // pred_fallthru
    _
  // Predicated region
  $region26: #{slam_forward.1} parent=0 // pred_check
    _
  $region27: #{slam_forward.1} parent=0 // pred_check_branch
    %26 = sbr.rel (0) target = $region29
  $region28: #{slam_forward.1} parent=0 // pred_region
    _
  $region29: #{slam_forward.1} parent=0 // pred_fallthru
    _
  // Predicated region
  $region30: #{slam_forward.1} parent=0 // pred_check
    _
  $region31: #{slam_forward.1} parent=0 // pred_check_branch
    %28 = sbr.rel (0) target = $region33
  $region32: #{slam_forward.1} parent=0 // pred_region
    _
  $region33: #{slam_forward.1} parent=0 // pred_fallthru
    _
  %v30 = vld [vmem:[%s0] ss:$4 sm:$0xf]
  %s31 = scalar_lea.vmem %s0, 1
  %v32 = vld [vmem:[%s31] ss:$4 sm:$0xf]
  %s33 = scalar_lea.vmem %s0, 2
  %v34 = vld [vmem:[%s33] ss:$4 sm:$0xf]
  %s35 = scalar_lea.vmem %s0, 3
  %v36 = vld [vmem:[%s35] ss:$4 sm:$0xf]
  %v38 = vrot.slane %v32, 4
  %v41 = vrot.slane %v36, 4
  %vm43 = vcmask 1043456
  %v44 = vsel %vm43, %v30, %v38
  %v45 = vsel %vm43, %v34, %v41
  %v46 = vpack.c.bf16 %v45, %v44
  %v47 = vld [vmem:[%s5] sm:$0x1]
  %v48 = vld [vmem:[%s5 + $0x1] sm:$0x1]
  %v49 = vld [vmem:[%s5 + $0x2] sm:$0x1]
  %v50 = vld [vmem:[%s5 + $0x3] sm:$0x1]
  %v51 = vld [vmem:[%s5 + $0x4] sm:$0x1]
  %v52 = vld [vmem:[%s5 + $0x5] sm:$0x1]
  %v53 = vld [vmem:[%s1] sm:$0xf]
  %v54 = vld [vmem:[%s1 + $0x4] sm:$0xf]
  %v55 = vld [vmem:[%s1 + $0x8] sm:$0xf]
  %v56 = vld [vmem:[%s1 + $0xc] sm:$0xf]
  %v57 = vlaneseq
  %v58 = vshrl.u32 %v57, 7
  %v59 = vsub.s32 0, %v58
  %v60 = vrot.slane %v47, %v59
  %v65 = vunpack.c.l.b16 %v53
  %v66 = vunpack.c.l.b16 %v54
  %v67 = vunpack.c.l.b16 %v55
  %v68 = vunpack.c.l.b16 %v56
  %v69 = vpack.c.b16 %v66, %v65
  %v70 = vpack.c.b16 %v68, %v67
  %vm73 = vcmask 261120
  %v75 = vsel %vm73, %v46, 0
  %77 = vmatprep.subr.bf16.mxu0 0
  %78 = vmatpush1.bf16.msra.mxu0 0
  %79 = vmatprep.subr.bf16.mxu0 0
  %80 = vmatpush1.bf16.msra.mxu0 0
  %81 = vmatprep.subr.bf16.mxu0 0
  %82 = vmatpush1.bf16.msra.mxu0 0
  %83 = vmatprep.subr.bf16.mxu0 0
  %84 = vmatpush1.bf16.msra.mxu0 0
  %85 = vmatprep.subr.bf16.mxu0 0
  %86 = vmatpush1.bf16.msra.mxu0 0
  %87 = vmatprep.subr.bf16.mxu0 0
  %88 = vmatpush1.bf16.msra.mxu0 0
  %89 = vmatprep.subr.bf16.mxu0 0
  %90 = vmatpush1.bf16.msra.mxu0 %v70
  %91 = vmatprep.subr.bf16.mxu0 0
  %92 = vmatpush1.bf16.msra.mxu0 %v69
  %93 = vmatprep.subr.bf16.mxu0 0
  %94 = vmatpush2.bf16.msra.mxu0 0
  %95 = vmatprep.subr.bf16.mxu0 0
  %96 = vmatpush2.bf16.msra.mxu0 0
  %97 = vmatprep.subr.bf16.mxu0 0
  %98 = vmatpush2.bf16.msra.mxu0 0
  %99 = vmatprep.subr.bf16.mxu0 0
  %100 = vmatpush2.bf16.msra.mxu0 0
  %101 = vmatprep.subr.bf16.mxu0 0
  %102 = vmatpush2.bf16.msra.mxu0 0
  %103 = vmatprep.subr.bf16.mxu0 0
  %104 = vmatpush2.bf16.msra.mxu0 0
  %105 = vmatprep.subr.bf16.mxu0 0
  %106 = vmatpush2.bf16.msra.mxu0 0
  %107 = vmatprep.subr.bf16.mxu0 0
  %108 = vmatpush2.bf16.msra.mxu0 0
  %109 = vmatprep.mubr.bf16.mxu0 0
  %110 = vmatmul.mubr.bf16.gmra.mxu0 %v75
  %v111 = vpop.f32.mrf.mxu0
  %v112 = vadd.f32 %v60, %v111
  %v113 = vpop.f32.mrf.mxu0
  %v114 = vpop.f32.mrf.mxu0
  %v115 = vadd.f32 %v60, %v114
  %v116 = vpop.f32.mrf.mxu0
  %117 = vdwg.mxu0
  %118 = vadd.xlane.f32.xlu0 %v112
  %v119 = vpop.xlane.xlu0 %118
  %120 = vadd.xlane.f32.xlu0 %v115
  %v121 = vpop.xlane.xlu0 %120
  %v122 = vrcp.pop 128.0
  %v123 = vmul.f32 %v119, %v122
  %v124 = vmul.f32 %v121, %v122
  %v125 = vmul.f32 %v112, %v112
  %v126 = vmul.f32 %v115, %v115
  %127 = vadd.xlane.f32.xlu0 %v125
  %v128 = vpop.xlane.xlu0 %127
  %129 = vadd.xlane.f32.xlu0 %v126
  %v130 = vpop.xlane.xlu0 %129
  %v131 = vmul.f32 %v128, %v122
  %v132 = vmul.f32 %v130, %v122
  %v133 = vmul.f32 %v123, %v123
  %v134 = vmul.f32 %v124, %v124
  %v135 = vsub.f32 %v131, %v133
  %v136 = vsub.f32 %v132, %v134
  %v137 = vmax.f32 %v135, 0.0
  %v138 = vmax.f32 %v136, 0.0
  %v139 = vsub.f32 %v112, %v123
  %v140 = vsub.f32 %v115, %v124
  %v141 = vadd.f32 %v137, 1e-05
  %v142 = vadd.f32 %v138, 1e-05
  %v143 = vrsqrt.pop %v141
  %v144 = vrsqrt.pop %v142
  %v145 = vmul.f32 %v139, %v143
  %v146 = vmul.f32 %v140, %v144
  %v147 = vlaneseq
  %v148 = vshrl.u32 %v147, 7
  %v149 = vsub.s32 0, %v148
  %v150 = vrot.slane %v48, %v149
  %v151 = vmul.f32 %v145, %v150
  %v152 = vmul.f32 %v146, %v150
  %v153 = vlaneseq
  %v154 = vshrl.u32 %v153, 7
  %v155 = vsub.s32 0, %v154
  %v156 = vrot.slane %v49, %v155
  %v157 = vadd.f32 %v151, %v156
  %v158 = vadd.f32 %v152, %v156
  %v159 = vmax.f32 %v157, 0.0
  %v160 = vmax.f32 %v158, 0.0
  %v161 = vpack.c.bf16 %v160, %v159
  %v162 = vld [vmem:[%s2] sm:$0xf]
  %v163 = vld [vmem:[%s2 + $0x4] sm:$0xf]
  %v164 = vld [vmem:[%s2 + $0x8] sm:$0xf]
  %v165 = vld [vmem:[%s2 + $0xc] sm:$0xf]
  %v166 = vld [vmem:[%s2 + $0x10] sm:$0xf]
  %v167 = vld [vmem:[%s2 + $0x14] sm:$0xf]
  %v168 = vld [vmem:[%s2 + $0x18] sm:$0xf]
  %v169 = vld [vmem:[%s2 + $0x1c] sm:$0xf]
  %v170 = vld [vmem:[%s2 + $0x20] sm:$0xf]
  %v171 = vld [vmem:[%s2 + $0x24] sm:$0xf]
  %v172 = vld [vmem:[%s2 + $0x28] sm:$0xf]
  %v173 = vld [vmem:[%s2 + $0x2c] sm:$0xf]
  %v174 = vld [vmem:[%s2 + $0x30] sm:$0xf]
  %v175 = vld [vmem:[%s2 + $0x34] sm:$0xf]
  %v176 = vld [vmem:[%s2 + $0x38] sm:$0xf]
  %v177 = vld [vmem:[%s2 + $0x3c] sm:$0xf]
  %v178 = vlaneseq
  %v179 = vshrl.u32 %v178, 7
  %v180 = vsub.s32 0, %v179
  %v181 = vrot.slane %v50, %v180
  %v198 = vunpack.c.l.b16 %v162
  %v199 = vunpack.c.l.b16 %v163
  %v200 = vunpack.c.l.b16 %v164
  %v201 = vunpack.c.l.b16 %v165
  %v202 = vunpack.c.l.b16 %v166
  %v203 = vunpack.c.l.b16 %v167
  %v204 = vunpack.c.l.b16 %v168
  %v205 = vunpack.c.l.b16 %v169
  %v206 = vunpack.c.l.b16 %v170
  %v207 = vunpack.c.l.b16 %v171
  %v208 = vunpack.c.l.b16 %v172
  %v209 = vunpack.c.l.b16 %v173
  %v210 = vunpack.c.l.b16 %v174
  %v211 = vunpack.c.l.b16 %v175
  %v212 = vunpack.c.l.b16 %v176
  %v213 = vunpack.c.l.b16 %v177
  %v214 = vpack.c.b16 %v199, %v198
  %v215 = vpack.c.b16 %v201, %v200
  %v216 = vpack.c.b16 %v203, %v202
  %v217 = vpack.c.b16 %v205, %v204
  %v218 = vpack.c.b16 %v207, %v206
  %v219 = vpack.c.b16 %v209, %v208
  %v220 = vpack.c.b16 %v211, %v210
  %v221 = vpack.c.b16 %v213, %v212
  %230 = vmatprep.subr.bf16.mxu0 0
  %231 = vmatpush1.bf16.msra.mxu0 %v221
  %232 = vmatprep.subr.bf16.mxu0 0
  %233 = vmatpush1.bf16.msra.mxu0 %v220
  %234 = vmatprep.subr.bf16.mxu0 0
  %235 = vmatpush1.bf16.msra.mxu0 %v219
  %236 = vmatprep.subr.bf16.mxu0 0
  %237 = vmatpush1.bf16.msra.mxu0 %v218
  %238 = vmatprep.subr.bf16.mxu0 0
  %239 = vmatpush1.bf16.msra.mxu0 %v217
  %240 = vmatprep.subr.bf16.mxu0 0
  %241 = vmatpush1.bf16.msra.mxu0 %v216
  %242 = vmatprep.subr.bf16.mxu0 0
  %243 = vmatpush1.bf16.msra.mxu0 %v215
  %244 = vmatprep.subr.bf16.mxu0 0
  %245 = vmatpush1.bf16.msra.mxu0 %v214
  %246 = vmatprep.subr.bf16.mxu0 0
  %247 = vmatpush2.bf16.msra.mxu0 0
  %248 = vmatprep.subr.bf16.mxu0 0
  %249 = vmatpush2.bf16.msra.mxu0 0
  %250 = vmatprep.subr.bf16.mxu0 0
  %251 = vmatpush2.bf16.msra.mxu0 0
  %252 = vmatprep.subr.bf16.mxu0 0
  %253 = vmatpush2.bf16.msra.mxu0 0
  %254 = vmatprep.subr.bf16.mxu0 0
  %255 = vmatpush2.bf16.msra.mxu0 0
  %256 = vmatprep.subr.bf16.mxu0 0
  %257 = vmatpush2.bf16.msra.mxu0 0
  %258 = vmatprep.subr.bf16.mxu0 0
  %259 = vmatpush2.bf16.msra.mxu0 0
  %260 = vmatprep.subr.bf16.mxu0 0
  %261 = vmatpush2.bf16.msra.mxu0 0
  %262 = vmatprep.mubr.bf16.mxu0 0
  %263 = vmatmul.mubr.bf16.gmra.mxu0 %v161
  %v264 = vpop.f32.mrf.mxu0
  %v265 = vadd.f32 %v181, %v264
  %v266 = vpop.f32.mrf.mxu0
  %v267 = vpop.f32.mrf.mxu0
  %v268 = vadd.f32 %v181, %v267
  %v269 = vpop.f32.mrf.mxu0
  %270 = vdwg.mxu0
  %271 = vadd.xlane.f32.xlu0 %v265
  %v272 = vpop.xlane.xlu0 %271
  %273 = vadd.xlane.f32.xlu0 %v268
  %v274 = vpop.xlane.xlu0 %273
  %v275 = vmul.f32 %v272, %v122
  %v276 = vmul.f32 %v274, %v122
  %v277 = vmul.f32 %v265, %v265
  %v278 = vmul.f32 %v268, %v268
  %279 = vadd.xlane.f32.xlu0 %v277
  %v280 = vpop.xlane.xlu0 %279
  %281 = vadd.xlane.f32.xlu0 %v278
  %v282 = vpop.xlane.xlu0 %281
  %v283 = vmul.f32 %v280, %v122
  %v284 = vmul.f32 %v282, %v122
  %v285 = vmul.f32 %v275, %v275
  %v286 = vmul.f32 %v276, %v276
  %v287 = vsub.f32 %v283, %v285
  %v288 = vsub.f32 %v284, %v286
  %v289 = vmax.f32 %v287, 0.0
  %v290 = vmax.f32 %v288, 0.0
  %v291 = vsub.f32 %v265, %v275
  %v292 = vsub.f32 %v268, %v276
  %v293 = vadd.f32 %v289, 1e-05
  %v294 = vadd.f32 %v290, 1e-05
  %v295 = vrsqrt.pop %v293
  %v296 = vrsqrt.pop %v294
  %v297 = vmul.f32 %v291, %v295
  %v298 = vmul.f32 %v292, %v296
  %v299 = vlaneseq
  %v300 = vshrl.u32 %v299, 7
  %v301 = vsub.s32 0, %v300
  %v302 = vrot.slane %v51, %v301
  %v303 = vmul.f32 %v297, %v302
  %v304 = vmul.f32 %v298, %v302
  %v305 = vlaneseq
  %v306 = vshrl.u32 %v305, 7
  %v307 = vsub.s32 0, %v306
  %v308 = vrot.slane %v52, %v307
  %v309 = vadd.f32 %v303, %v308
  %v310 = vadd.f32 %v304, %v308
  %v311 = vmax.f32 %v309, 0.0
  %v312 = vmax.f32 %v310, 0.0
  %v313 = vpack.c.bf16 %v312, %v311
  %v314 = vld [vmem:[%s3] sm:$0xff]
  %v315 = vld [vmem:[%s3 + $0x8] sm:$0xff]
  %v316 = vld [vmem:[%s3 + $0x10] sm:$0xff]
  %v317 = vld [vmem:[%s3 + $0x18] sm:$0xff]
  %v318 = vld [vmem:[%s3 + $0x20] sm:$0xff]
  %v319 = vld [vmem:[%s3 + $0x28] sm:$0xff]
  %v320 = vld [vmem:[%s3 + $0x30] sm:$0xff]
  %v321 = vld [vmem:[%s3 + $0x38] sm:$0xff]
  %v322 = vld [vmem:[%s3 + $0x40] sm:$0xff]
  %v323 = vld [vmem:[%s3 + $0x48] sm:$0xff]
  %v324 = vld [vmem:[%s3 + $0x50] sm:$0xff]
  %v325 = vld [vmem:[%s3 + $0x58] sm:$0xff]
  %v326 = vld [vmem:[%s3 + $0x60] sm:$0xff]
  %v327 = vld [vmem:[%s3 + $0x68] sm:$0xff]
  %v328 = vld [vmem:[%s3 + $0x70] sm:$0xff]
  %v329 = vld [vmem:[%s3 + $0x78] sm:$0xff]
  %v330 = vld [vmem:[%s6] sm:$0x3]
  %v332 = vlaneseq
  %v333 = vshrl.u32 %v332, 7
  %v334 = vsub.s32 0, %v333
  %v335 = vrot.slane %v330, %v334
  %v336 = vlaneseq
  %v337 = vshrl.u32 %v336, 7
  %v338 = vsub.s32 1, %v337
  %v339 = vrot.slane %v330, %v338
  %v358 = vunpack.c.l.b16 %v314
  %v359 = vunpack.c.h.b16 %v314
  %v360 = vunpack.c.l.b16 %v315
  %v361 = vunpack.c.h.b16 %v315
  %v362 = vunpack.c.l.b16 %v316
  %v363 = vunpack.c.h.b16 %v316
  %v364 = vunpack.c.l.b16 %v317
  %v365 = vunpack.c.h.b16 %v317
  %v366 = vunpack.c.l.b16 %v318
  %v367 = vunpack.c.h.b16 %v318
  %v368 = vunpack.c.l.b16 %v319
  %v369 = vunpack.c.h.b16 %v319
  %v370 = vunpack.c.l.b16 %v320
  %v371 = vunpack.c.h.b16 %v320
  %v372 = vunpack.c.l.b16 %v321
  %v373 = vunpack.c.h.b16 %v321
  %v374 = vunpack.c.l.b16 %v322
  %v375 = vunpack.c.h.b16 %v322
  %v376 = vunpack.c.l.b16 %v323
  %v377 = vunpack.c.h.b16 %v323
  %v378 = vunpack.c.l.b16 %v324
  %v379 = vunpack.c.h.b16 %v324
  %v380 = vunpack.c.l.b16 %v325
  %v381 = vunpack.c.h.b16 %v325
  %v382 = vunpack.c.l.b16 %v326
  %v383 = vunpack.c.h.b16 %v326
  %v384 = vunpack.c.l.b16 %v327
  %v385 = vunpack.c.h.b16 %v327
  %v386 = vunpack.c.l.b16 %v328
  %v387 = vunpack.c.h.b16 %v328
  %v388 = vunpack.c.l.b16 %v329
  %v389 = vunpack.c.h.b16 %v329
  %v390 = vpack.c.b16 %v360, %v358
  %v391 = vpack.c.b16 %v361, %v359
  %v392 = vpack.c.b16 %v364, %v362
  %v393 = vpack.c.b16 %v365, %v363
  %v394 = vpack.c.b16 %v368, %v366
  %v395 = vpack.c.b16 %v369, %v367
  %v396 = vpack.c.b16 %v372, %v370
  %v397 = vpack.c.b16 %v373, %v371
  %v398 = vpack.c.b16 %v376, %v374
  %v399 = vpack.c.b16 %v377, %v375
  %v400 = vpack.c.b16 %v380, %v378
  %v401 = vpack.c.b16 %v381, %v379
  %v402 = vpack.c.b16 %v384, %v382
  %v403 = vpack.c.b16 %v385, %v383
  %v404 = vpack.c.b16 %v388, %v386
  %v405 = vpack.c.b16 %v389, %v387
  %422 = vmatprep.subr.bf16.mxu0 %v405
  %423 = vmatpush1.bf16.msra.mxu0 %v404
  %424 = vmatprep.subr.bf16.mxu0 %v403
  %425 = vmatpush1.bf16.msra.mxu0 %v402
  %426 = vmatprep.subr.bf16.mxu0 %v401
  %427 = vmatpush1.bf16.msra.mxu0 %v400
  %428 = vmatprep.subr.bf16.mxu0 %v399
  %429 = vmatpush1.bf16.msra.mxu0 %v398
  %430 = vmatprep.subr.bf16.mxu0 %v397
  %431 = vmatpush1.bf16.msra.mxu0 %v396
  %432 = vmatprep.subr.bf16.mxu0 %v395
  %433 = vmatpush1.bf16.msra.mxu0 %v394
  %434 = vmatprep.subr.bf16.mxu0 %v393
  %435 = vmatpush1.bf16.msra.mxu0 %v392
  %436 = vmatprep.subr.bf16.mxu0 %v391
  %437 = vmatpush1.bf16.msra.mxu0 %v390
  %438 = vmatprep.subr.bf16.mxu0 0
  %439 = vmatpush2.bf16.msra.mxu0 0
  %440 = vmatprep.subr.bf16.mxu0 0
  %441 = vmatpush2.bf16.msra.mxu0 0
  %442 = vmatprep.subr.bf16.mxu0 0
  %443 = vmatpush2.bf16.msra.mxu0 0
  %444 = vmatprep.subr.bf16.mxu0 0
  %445 = vmatpush2.bf16.msra.mxu0 0
  %446 = vmatprep.subr.bf16.mxu0 0
  %447 = vmatpush2.bf16.msra.mxu0 0
  %448 = vmatprep.subr.bf16.mxu0 0
  %449 = vmatpush2.bf16.msra.mxu0 0
  %450 = vmatprep.subr.bf16.mxu0 0
  %451 = vmatpush2.bf16.msra.mxu0 0
  %452 = vmatprep.subr.bf16.mxu0 0
  %453 = vmatpush2.bf16.msra.mxu0 0
  %454 = vmatprep.mubr.bf16.mxu0 0
  %455 = vmatmul.mubr.bf16.gmra.mxu0 %v313
  %v456 = vpop.f32.mrf.mxu0
  %v457 = vadd.f32 %v335, %v456
  %v458 = vpop.f32.mrf.mxu0
  %v459 = vadd.f32 %v339, %v458
  %v460 = vpop.f32.mrf.mxu0
  %v461 = vadd.f32 %v335, %v460
  %v462 = vpop.f32.mrf.mxu0
  %v463 = vadd.f32 %v339, %v462
  %464 = vdwg.mxu0
  %v465 = vmax.f32 %v457, 0.0
  %v466 = vmax.f32 %v459, 0.0
  %v467 = vmax.f32 %v461, 0.0
  %v468 = vmax.f32 %v463, 0.0
  %v469 = vpack.c.bf16 %v467, %v465
  %v470 = vpack.c.bf16 %v468, %v466
  %v471 = vld [vmem:[%s4] sm:$0xf]
  %v472 = vld [vmem:[%s4 + $0x4] sm:$0xf]
  %v473 = vld [vmem:[%s4 + $0x8] sm:$0xf]
  %v474 = vld [vmem:[%s4 + $0xc] sm:$0xf]
  %v475 = vld [vmem:[%s4 + $0x10] sm:$0xf]
  %v476 = vld [vmem:[%s4 + $0x14] sm:$0xf]
  %v477 = vld [vmem:[%s4 + $0x18] sm:$0xf]
  %v478 = vld [vmem:[%s4 + $0x1c] sm:$0xf]
  %v479 = vld [vmem:[%s4 + $0x20] sm:$0xf]
  %v480 = vld [vmem:[%s4 + $0x24] sm:$0xf]
  %v481 = vld [vmem:[%s4 + $0x28] sm:$0xf]
  %v482 = vld [vmem:[%s4 + $0x2c] sm:$0xf]
  %v483 = vld [vmem:[%s4 + $0x30] sm:$0xf]
  %v484 = vld [vmem:[%s4 + $0x34] sm:$0xf]
  %v485 = vld [vmem:[%s4 + $0x38] sm:$0xf]
  %v486 = vld [vmem:[%s4 + $0x3c] sm:$0xf]
  %v487 = vld [vmem:[%s4 + $0x40] sm:$0xf]
  %v488 = vld [vmem:[%s4 + $0x44] sm:$0xf]
  %v489 = vld [vmem:[%s4 + $0x48] sm:$0xf]
  %v490 = vld [vmem:[%s4 + $0x4c] sm:$0xf]
  %v491 = vld [vmem:[%s4 + $0x50] sm:$0xf]
  %v492 = vld [vmem:[%s4 + $0x54] sm:$0xf]
  %v493 = vld [vmem:[%s4 + $0x58] sm:$0xf]
  %v494 = vld [vmem:[%s4 + $0x5c] sm:$0xf]
  %v495 = vld [vmem:[%s7] sm:$0x1]
  %v497 = vlaneseq
  %v498 = vshrl.u32 %v497, 7
  %v499 = vsub.s32 0, %v498
  %v500 = vrot.slane %v495, %v499
  %v526 = vunpack.c.l.b16 %v471
  %v527 = vunpack.c.l.b16 %v472
  %v528 = vunpack.c.l.b16 %v473
  %v529 = vunpack.c.l.b16 %v474
  %v530 = vunpack.c.l.b16 %v475
  %v531 = vunpack.c.l.b16 %v476
  %v532 = vunpack.c.l.b16 %v477
  %v533 = vunpack.c.l.b16 %v478
  %v534 = vunpack.c.l.b16 %v479
  %v535 = vunpack.c.l.b16 %v480
  %v536 = vunpack.c.l.b16 %v481
  %v537 = vunpack.c.l.b16 %v482
  %v538 = vunpack.c.l.b16 %v483
  %v539 = vunpack.c.l.b16 %v484
  %v540 = vunpack.c.l.b16 %v485
  %v541 = vunpack.c.l.b16 %v486
  %v542 = vunpack.c.l.b16 %v487
  %v543 = vunpack.c.l.b16 %v488
  %v544 = vunpack.c.l.b16 %v489
  %v545 = vunpack.c.l.b16 %v490
  %v546 = vunpack.c.l.b16 %v491
  %v547 = vunpack.c.l.b16 %v492
  %v548 = vunpack.c.l.b16 %v493
  %v549 = vunpack.c.l.b16 %v494
  %v550 = vpack.c.b16 %v527, %v526
  %v551 = vpack.c.b16 %v529, %v528
  %v552 = vpack.c.b16 %v531, %v530
  %v553 = vpack.c.b16 %v533, %v532
  %v554 = vpack.c.b16 %v535, %v534
  %v555 = vpack.c.b16 %v537, %v536
  %v556 = vpack.c.b16 %v539, %v538
  %v557 = vpack.c.b16 %v541, %v540
  %v558 = vpack.c.b16 %v543, %v542
  %v559 = vpack.c.b16 %v545, %v544
  %v560 = vpack.c.b16 %v547, %v546
  %v561 = vpack.c.b16 %v549, %v548
  %vm574 = vcmask 523264
  %v576 = vsel %vm574, %v470, 0
  %578 = vmatprep.subr.bf16.mxu0 0
  %579 = vmatpush1.bf16.msra.mxu0 %v557
  %580 = vmatprep.subr.bf16.mxu0 0
  %581 = vmatpush1.bf16.msra.mxu0 %v556
  %582 = vmatprep.subr.bf16.mxu0 0
  %583 = vmatpush1.bf16.msra.mxu0 %v555
  %584 = vmatprep.subr.bf16.mxu0 0
  %585 = vmatpush1.bf16.msra.mxu0 %v554
  %586 = vmatprep.subr.bf16.mxu0 0
  %587 = vmatpush1.bf16.msra.mxu0 %v553
  %588 = vmatprep.subr.bf16.mxu0 0
  %589 = vmatpush1.bf16.msra.mxu0 %v552
  %590 = vmatprep.subr.bf16.mxu0 0
  %591 = vmatpush1.bf16.msra.mxu0 %v551
  %592 = vmatprep.subr.bf16.mxu0 0
  %593 = vmatpush1.bf16.msra.mxu0 %v550
  %594 = vmatprep.subr.bf16.mxu0 0
  %595 = vmatpush2.bf16.msra.mxu0 0
  %596 = vmatprep.subr.bf16.mxu0 0
  %597 = vmatpush2.bf16.msra.mxu0 0
  %598 = vmatprep.subr.bf16.mxu0 0
  %599 = vmatpush2.bf16.msra.mxu0 0
  %600 = vmatprep.subr.bf16.mxu0 0
  %601 = vmatpush2.bf16.msra.mxu0 0
  %602 = vmatprep.subr.bf16.mxu0 0
  %603 = vmatpush2.bf16.msra.mxu0 %v561
  %604 = vmatprep.subr.bf16.mxu0 0
  %605 = vmatpush2.bf16.msra.mxu0 %v560
  %606 = vmatprep.subr.bf16.mxu0 0
  %607 = vmatpush2.bf16.msra.mxu0 %v559
  %608 = vmatprep.subr.bf16.mxu0 0
  %609 = vmatpush2.bf16.msra.mxu0 %v558
  %610 = vmatprep.mubr.bf16.mxu0 %v576
  %611 = vmatmul.mubr.bf16.gmra.mxu0 %v469
  %v612 = vpop.f32.mrf.mxu0
  %v613 = vadd.f32 %v500, %v612
  %v614 = vpop.f32.mrf.mxu0
  %v615 = vpop.f32.mrf.mxu0
  %v616 = vadd.f32 %v500, %v615
  %v617 = vpop.f32.mrf.mxu0
  %618 = vdwg.mxu0
  %v619 = vlaneseq
  %v620 = vand.u32 %v619, 127
  %vm621 = vcmp.ge.s32.totalorder %v620, 8
  %vm622 = vcmp.lt.s32.totalorder %v620, 16
  %vm623 = vmand %vm621, %vm622
  %v624 = vmul.f32 %v613, 0.5
  %v625 = vmul.f32 %v616, 0.5
  %v626 = vtanh.pop %v624
  %v627 = vtanh.pop %v625
  %v628 = vadd.f32 %v626, 1.0
  %v629 = vadd.f32 %v627, 1.0
  %v630 = vmul.f32 %v628, 0.5
  %v631 = vmul.f32 %v629, 0.5
  %v632 = vsel %vm623, %v630, %v613
  %v633 = vsel %vm623, %v631, %v616
  %vm634 = vcmp.ge.s32.totalorder %v620, 16
  %vm635 = vcmp.lt.s32.totalorder %v620, 24
  %vm636 = vmand %vm634, %vm635
  %v637 = vmax.f32 %v613, 0.0
  %v638 = vmax.f32 %v616, 0.0
  %v639 = vand.u32 2147483647, %v613
  %v640 = vand.u32 2147483647, %v616
  %v641 = vsub.f32 0.0, %v639
  %v642 = vsub.f32 0.0, %v640
  %v643 = vmul.f32 %v641, 1.442695
  %v644 = vpow.pop %v643
  %v645 = vmul.f32 %v642, 1.442695
  %v646 = vpow.pop %v645
  %v647 = vadd.f32 %v644, 1.0
  %v648 = vlog2.pop %v647
  %v649 = vmul.f32 %v648, 0.6931472
  %v650 = vmul.f32 -0.5, %v644
  %v651 = vadd.f32 %v650, 1.0
  %v652 = vmul.f32 %v651, %v644
  %v653 = vand.u32 2147483647, %v644
  %vm654 = vcmp.lt.f32.partialorder %v653, 0.0004427343
  %v655 = vsel %vm654, %v652, %v649
  %v656 = vadd.f32 %v646, 1.0
  %v657 = vlog2.pop %v656
  %v658 = vmul.f32 %v657, 0.6931472
  %v659 = vmul.f32 -0.5, %v646
  %v660 = vadd.f32 %v659, 1.0
  %v661 = vmul.f32 %v660, %v646
  %v662 = vand.u32 2147483647, %v646
  %vm663 = vcmp.lt.f32.partialorder %v662, 0.0004427343
  %v664 = vsel %vm663, %v661, %v658
  %v665 = vadd.f32 %v637, %v655
  %v666 = vadd.f32 %v638, %v664
  %v667 = vsel %vm636, %v665, %v632
  %v668 = vsel %vm636, %v666, %v633
  %v669 = vsel %vm635, %v667, 0.0
  %v670 = vsel %vm635, %v668, 0.0
  %vm671 = vcmask 257024
  %672 = vst.msk [vmem:[%s8] sm:$0xf] %vm671, %v669
  %674 = vrot.lane.b32.xlu0 %v669, 32
  %v675 = vpop.permute.xlu0 %674
  %vm677 = vcmask 523524
  %678 = vst.msk [vmem:[%s8 - $0x4] sm:$0xf0] %vm677, %v675
  %680 = vrot.lane.b32.xlu0 %v670, 64
  %v681 = vpop.permute.xlu0 %680
  %vm683 = vcmask 781824
  %684 = vst.msk [vmem:[%s8] sm:$0xf] %vm683, %v681
  %685 = vrot.lane.b32.xlu0 %v670, 96
  %v686 = vpop.permute.xlu0 %685
  %vm688 = vcmask 1048324
  %689 = vst.msk [vmem:[%s8 - $0x4] sm:$0xf0] %vm688, %v686
  // Predicated region
  $region34: #{slam_forward.1} parent=0 // pred_check
    _
  $region35: #{slam_forward.1} parent=0 // pred_check_branch
    %691 = sbr.rel (0) target = $region37
  $region36: #{slam_forward.1} parent=0 // pred_region
    _
  $region37: #{slam_forward.1} parent=0 // pred_fallthru
    _
  // Predicated region
  $region38: #{slam_forward.1} parent=0 // pred_check
    _
  $region39: #{slam_forward.1} parent=0 // pred_check_branch
    %693 = sbr.rel (0) target = $region41
  $region40: #{slam_forward.1} parent=0 // pred_region
    _
  $region41: #{slam_forward.1} parent=0 // pred_fallthru
    _

</llo_original>
